<compile_context>
chip_gen: v7x
topology: tpu7x:2x2x1
jax: 0.10.0
libtpu: 0.0.40
codegen_flags: <defaults>
</compile_context>

<pallas_src>
import functools

import numpy as np
import jax
import jax.numpy as jnp
from jax.experimental import pallas as pl
from jax.experimental.pallas import tpu as pltpu

_LANE = 128
_SUBLANE = 8


def _pad_lane(c):
    return max(_LANE, -(-int(c) // _LANE) * _LANE)


def _pad_sub(r):
    return max(_SUBLANE, -(-int(r) // _SUBLANE) * _SUBLANE)


def _num_parts(dtype):
    # bf16 inputs are exactly representable with a single bf16 part; anything
    # wider goes through a 3-way exact bf16 split (error ~2^-26 relative).
    return 1 if dtype == jnp.bfloat16 else 3


def _vmem_capacity_bytes():
    try:
        return int(pltpu.get_tpu_info().vmem_capacity_bytes)
    except Exception:
        return 64 * 1024 * 1024  # conservative fallback = v7x per-TC VMEM


@functools.lru_cache(maxsize=None)
def _selectors(dx, dy, parts_x, parts_y, fuse):
    """Constant 0/1 bf16 selectors implementing
         m_rep[:, k] = m[:, k // (dy+1)]   and   y_til[:, k] = ym[:, k % (dy+1)]
       for the K-packed operands [part_0|..|part_{p-1}|1]."""
    dy1 = dy + 1
    d = (dx + 1) * dy1
    dp = _pad_lane(d)
    col = np.arange(d)
    i_idx = col // dy1
    j_idx = col % dy1
    rx = (i_idx[None, :] == (np.arange(dx)[:, None] + 1)).astype(np.float32)  # (dx, d)
    ty = (j_idx[None, :] == (np.arange(dy)[:, None] + 1)).astype(np.float32)  # (dy, d)
    r0 = (i_idx == 0).astype(np.float32)[None, :]                             # bias row (leading 1 of m)
    t0 = (j_idx == 0).astype(np.float32)[None, :]                             # bias row (leading 1 of ym)
    sx = np.concatenate([np.tile(rx, (parts_x, 1)), r0], axis=0)  # (parts_x*dx + 1, d)
    sy = np.concatenate([np.tile(ty, (parts_y, 1)), t0], axis=0)  # (parts_y*dy + 1, d)
    if fuse:
        kx, ky = sx.shape[0], sy.shape[0]
        # Block-diagonal fused selector: columns [0, d)      -> m_rep
        #                                 columns [dp, dp+d) -> y_til (128-aligned start)
        s = np.zeros((kx + ky, dp + d), np.float32)
        s[:kx, :d] = sx
        s[kx:, dp:] = sy
        return (jnp.asarray(s, dtype=jnp.bfloat16),)
    return (jnp.asarray(sx, dtype=jnp.bfloat16), jnp.asarray(sy, dtype=jnp.bfloat16))


def _pack_operand(v, parts):
    """Packed K-slab [part_0 | ... | part_{parts-1} | 1] in f32; every value is
    exactly bf16-representable, so the later bf16 cast is exact."""
    cols = []
    if parts == 1:
        cols.append(v.astype(jnp.bfloat16).astype(jnp.float32))
    else:
        r = v.astype(jnp.float32)
        for _ in range(parts):
            p = r.astype(jnp.bfloat16).astype(jnp.float32)
            cols.append(p)
            r = r - p
    cols.append(jnp.ones((v.shape[0], 1), jnp.float32))
    return jnp.concatenate(cols, axis=1)


def _fused_kernel(x_ref, y_ref, s_ref, o_ref, *, d, dp, parts_x, parts_y):
    # x_ref: (bm, dx)  y_ref: (bm, dy)  s_ref: (K, dp+d) bf16 0/1  o_ref: (bm, d)
    zx = _pack_operand(x_ref[...], parts_x)
    zy = _pack_operand(y_ref[...], parts_y)
    z = jnp.concatenate([zx, zy], axis=1).astype(jnp.bfloat16)        # (bm, K)
    zw = jnp.dot(z, s_ref[...], preferred_element_type=jnp.float32)   # (bm, dp+d), one MXU pass
    m_rep = zw[:, :d]          # m[:, k // (dy+1)]        (prefix slice)
    y_til = zw[:, dp:]         # ym[:, k %  (dy+1)]       (128-aligned slice)
    o_ref[...] = (m_rep * y_til).astype(o_ref.dtype)


def _split_kernel(x_ref, y_ref, sx_ref, sy_ref, o_ref, *, parts_x, parts_y):
    # Used when the fused contraction would exceed one v5e MXU K-pass (K > 128).
    zx = _pack_operand(x_ref[...], parts_x).astype(jnp.bfloat16)
    zy = _pack_operand(y_ref[...], parts_y).astype(jnp.bfloat16)
    m_rep = jnp.dot(zx, sx_ref[...], preferred_element_type=jnp.float32)
    y_til = jnp.dot(zy, sy_ref[...], preferred_element_type=jnp.float32)
    o_ref[...] = (m_rep * y_til).astype(o_ref.dtype)


def tensor_fusion(x, y, *, bm=1024):
    assert x.shape[:-1] == y.shape[:-1], "leading (non-feature) dims must match"
    nonfeature = x.shape[:-1]
    dx, dy = int(x.shape[-1]), int(y.shape[-1])
    d = (dx + 1) * (dy + 1)
    dp = _pad_lane(d)
    out_dtype = jnp.result_type(x.dtype, y.dtype)

    n = int(np.prod(nonfeature)) if nonfeature else 1
    if n == 0:
        return jnp.zeros((*nonfeature, d), out_dtype)

    xf = x.reshape(n, dx)
    yf = y.reshape(n, dy)

    parts_x = _num_parts(x.dtype)
    parts_y = _num_parts(y.dtype)
    kx = parts_x * dx + 1
    ky = parts_y * dy + 1
    k_tot = kx + ky
    # Single fused matmul only if the packed contraction fits one MXU K-pass on
    # every generation (v5e depth = 128); otherwise one packed matmul per side.
    fuse = k_tot <= 128

    selectors = _selectors(dx, dy, parts_x, parts_y, fuse)

    # ---- VMEM budget & row-tile selection -----------------------------------
    # ~48 MiB on v7x (64 MiB/TC), ~96 MiB on v5e/v6e (128 MiB/TC).
    vmem_limit = min((_vmem_capacity_bytes() * 3) // 4, 100 * 1024 * 1024)
    if fuse:
        const_bytes = 2 * _pad_sub(k_tot) * _pad_lane(dp + d) * 2     # selector, 2 buffers, bf16
    else:
        const_bytes = 2 * (_pad_sub(kx) + _pad_sub(ky)) * dp * 2
    row_bytes = (
        2 * _pad_lane(dx) * xf.dtype.itemsize        # x block, double-buffered
        + 2 * _pad_lane(dy) * yf.dtype.itemsize      # y block, double-buffered
        + 2 * dp * jnp.dtype(out_dtype).itemsize     # out block, double-buffered
        + 4 * 2 * dp                                 # f32 matmul result(s) (bm, <=2*dp)
        + 4 * dp                                     # f32 product before the output cast
        + 6 * _pad_lane(k_tot)                       # packed K slab (f32 + bf16 copies)
        + 16 * (_pad_lane(dx) + _pad_lane(dy))       # split-part temporaries (headroom)
    )
    avail = vmem_limit - const_bytes - 2 * 1024 * 1024   # reserve for internal scratch
    bm_cap = (avail // row_bytes) // 8 * 8 if avail > 0 else 0
    bm_cap = max(8, bm_cap)
    # TODO(synk): for very large D ((dx+1)*(dy+1) in the tens of thousands) the
    # resident selector itself outgrows VMEM; that regime needs a second grid
    # axis over 128-aligned column chunks of D.
    bm_eff = max(8, min(bm, bm_cap) // 8 * 8)
    if n <= bm_eff:
        if n >= 16:
            # Keep >= 2 grid blocks so both of v7x's TensorCores get work.
            bm_eff = (((n + 1) // 2) + 7) // 8 * 8
        else:
            bm_eff = n          # single block covering all rows (always legal)
    grid = (pl.cdiv(n, bm_eff),)  # ragged last row block handled by Pallas

    if fuse:
        kernel = functools.partial(_fused_kernel, d=d, dp=dp,
                                   parts_x=parts_x, parts_y=parts_y)
        sel_specs = [pl.BlockSpec((k_tot, dp + d), lambda i: (0, 0))]
    else:
        kernel = functools.partial(_split_kernel, parts_x=parts_x, parts_y=parts_y)
        sel_specs = [pl.BlockSpec((kx, d), lambda i: (0, 0)),
                     pl.BlockSpec((ky, d), lambda i: (0, 0))]

    out2d = pl.pallas_call(
        kernel,
        out_shape=jax.ShapeDtypeStruct((n, d), out_dtype),
        grid_spec=pltpu.PrefetchScalarGridSpec(
            num_scalar_prefetch=0,
            grid=grid,
            in_specs=[pl.BlockSpec((bm_eff, dx), lambda i: (i, 0)),
                      pl.BlockSpec((bm_eff, dy), lambda i: (i, 0)),
                      *sel_specs],
            out_specs=pl.BlockSpec((bm_eff, d), lambda i: (i, 0)),   # lane-dense writeback
        ),
        compiler_params=pltpu.CompilerParams(
            dimension_semantics=("parallel",),
            vmem_limit_bytes=int(vmem_limit),
        ),
    )(xf, yf, *selectors)

    # Contiguous reshape back to (*nonfeature, D) is free (no extra HBM pass).
    return out2d.reshape(*nonfeature, d)


def _reference(x, y):
    nonfeature = x.shape[:-1]
    m = jnp.concatenate([jnp.ones((*nonfeature, 1), x.dtype), x], axis=-1)
    ym = jnp.concatenate([jnp.ones((*nonfeature, 1), y.dtype), y], axis=-1)
    fused = jnp.einsum("...i,...j->...ij", m, ym)
    return fused.reshape(*nonfeature, -1)


if __name__ == "__main__":
    key = jax.random.PRNGKey(0)
    kx_, ky_ = jax.random.split(key)
    # small shapes: batch=2, seq=8, dx=16, dy=8  ->  output (2, 8, 17*9=153)
    x = jax.random.normal(kx_, (2, 8, 16), dtype=jnp.float32)
    y = jax.random.normal(ky_, (2, 8, 8), dtype=jnp.float32)

    out = tensor_fusion(x, y)
    out = jax.block_until_ready(out)

    ref = _reference(x, y)
    assert out.shape == ref.shape == (2, 8, 153), out.shape
    assert jnp.allclose(out, ref, atol=1e-6, rtol=1e-6), "mismatch vs reference (f32)"

    # Exercise the bf16 fast path (single packed part per side).
    xb, yb = x.astype(jnp.bfloat16), y.astype(jnp.bfloat16)
    outb = jax.block_until_ready(tensor_fusion(xb, yb))
    refb = _reference(xb, yb)
    assert outb.shape == refb.shape
    assert jnp.allclose(outb.astype(jnp.float32), refb.astype(jnp.float32),
                        atol=2e-2, rtol=2e-2), "mismatch vs reference (bf16)"

    print("KERNEL_OK")
</pallas_src>

<mosaic_0001>
module attributes {stable_mosaic.version = 11 : i64} {
  func.func @_fused_kernel(%arg0: i32, %arg1: memref<8x16xf32, #tpu.memory_space<vmem>>, %arg2: memref<8x8xf32, #tpu.memory_space<vmem>>, %arg3: memref<74x409xbf16, #tpu.memory_space<vmem>>, %arg4: memref<8x153xf32, #tpu.memory_space<vmem>>) attributes {dimension_semantics = [#tpu.dimension_semantics<parallel>], iteration_bounds = array<i64: 2>, scalar_prefetch = 0 : i64, scratch_operands = 0 : i64, tpu.core_type = #tpu.core_type<tc>, window_params = [{transform_indices = @transform_0, window_bounds = array<i64: 8, 16>}, {transform_indices = @transform_1, window_bounds = array<i64: 8, 8>}, {pipeline_mode = #tpu.pipeline_mode<synchronous>, transform_indices = @transform_2, window_bounds = array<i64: 74, 409>}, {transform_indices = @transform_3, window_bounds = array<i64: 8, 153>}]} {
    %c0 = arith.constant 0 : index
    %c0_0 = arith.constant 0 : index
    %0 = vector.load %arg1[%c0, %c0_0] : memref<8x16xf32, #tpu.memory_space<vmem>>, vector<8x16xf32>
    %1 = arith.truncf %0 : vector<8x16xf32> to vector<8x16xbf16>
    %2 = arith.extf %1 : vector<8x16xbf16> to vector<8x16xf32>
    %3 = arith.subf %0, %2 : vector<8x16xf32>
    %4 = arith.truncf %3 : vector<8x16xf32> to vector<8x16xbf16>
    %5 = arith.extf %4 : vector<8x16xbf16> to vector<8x16xf32>
    %6 = arith.subf %3, %5 : vector<8x16xf32>
    %7 = arith.truncf %6 : vector<8x16xf32> to vector<8x16xbf16>
    %8 = arith.extf %7 : vector<8x16xbf16> to vector<8x16xf32>
    %cst = arith.constant 1.000000e+00 : f32
    %9 = vector.broadcast %cst : f32 to vector<8x1xf32>
    %10 = tpu.concatenate %2, %5, %8, %9 in 1 : vector<8x16xf32>, vector<8x16xf32>, vector<8x16xf32>, vector<8x1xf32> -> vector<8x49xf32>
    %c0_1 = arith.constant 0 : index
    %c0_2 = arith.constant 0 : index
    %11 = vector.load %arg2[%c0_1, %c0_2] : memref<8x8xf32, #tpu.memory_space<vmem>>, vector<8x8xf32>
    %12 = arith.truncf %11 : vector<8x8xf32> to vector<8x8xbf16>
    %13 = arith.extf %12 : vector<8x8xbf16> to vector<8x8xf32>
    %14 = arith.subf %11, %13 : vector<8x8xf32>
    %15 = arith.truncf %14 : vector<8x8xf32> to vector<8x8xbf16>
    %16 = arith.extf %15 : vector<8x8xbf16> to vector<8x8xf32>
    %17 = arith.subf %14, %16 : vector<8x8xf32>
    %18 = arith.truncf %17 : vector<8x8xf32> to vector<8x8xbf16>
    %19 = arith.extf %18 : vector<8x8xbf16> to vector<8x8xf32>
    %cst_3 = arith.constant 1.000000e+00 : f32
    %20 = vector.broadcast %cst_3 : f32 to vector<8x1xf32>
    %21 = tpu.concatenate %13, %16, %19, %20 in 1 : vector<8x8xf32>, vector<8x8xf32>, vector<8x8xf32>, vector<8x1xf32> -> vector<8x25xf32>
    %22 = tpu.concatenate %10, %21 in 1 : vector<8x49xf32>, vector<8x25xf32> -> vector<8x74xf32>
    %23 = arith.truncf %22 : vector<8x74xf32> to vector<8x74xbf16>
    %c0_4 = arith.constant 0 : index
    %c0_5 = arith.constant 0 : index
    %24 = vector.load %arg3[%c0_4, %c0_5] : memref<74x409xbf16, #tpu.memory_space<vmem>>, vector<74x409xbf16>
    %cst_6 = arith.constant dense<0.000000e+00> : vector<8x409xf32>
    %25 = tpu.matmul %23, %24, %cst_6 {dimension_numbers = #tpu.dot_dimension_numbers<[1], [0], [0], [1], [0, 0, 1, 1], [], []>} : vector<8x74xbf16>, vector<74x409xbf16>, vector<8x409xf32> -> vector<8x409xf32>
    %26 = vector.extract_strided_slice %25 {offsets = [0, 0], sizes = [8, 153], strides = [1, 1]} : vector<8x409xf32> to vector<8x153xf32>
    %27 = vector.extract_strided_slice %25 {offsets = [0, 256], sizes = [8, 153], strides = [1, 1]} : vector<8x409xf32> to vector<8x153xf32>
    %28 = arith.mulf %26, %27 : vector<8x153xf32>
    %c0_7 = arith.constant 0 : index
    %c0_8 = arith.constant 0 : index
    %29 = vector.load %arg4[%c0_7, %c0_8] : memref<8x153xf32, #tpu.memory_space<vmem>>, vector<8x153xf32>
    tpu.vector_store %arg4[%c0_7, %c0_8], %28 {strides = array<i32>} : memref<8x153xf32, #tpu.memory_space<vmem>>, vector<8x153xf32>,
    return
  }
  func.func @transform_0(%arg0: i32) -> (i32, i32) {
    %c0_i32 = arith.constant 0 : i32
    %c0_i32_0 = arith.constant 0 : i32
    return %arg0, %c0_i32 : i32, i32
  }
  func.func @transform_1(%arg0: i32) -> (i32, i32) {
    %c0_i32 = arith.constant 0 : i32
    %c0_i32_0 = arith.constant 0 : i32
    return %arg0, %c0_i32 : i32, i32
  }
  func.func @transform_2(%arg0: i32) -> (i32, i32) {
    %c0_i32 = arith.constant 0 : i32
    %c0_i32_0 = arith.constant 0 : i32
    %c0_i32_1 = arith.constant 0 : i32
    return %c0_i32, %c0_i32_0 : i32, i32
  }
  func.func @transform_3(%arg0: i32) -> (i32, i32) {
    %c0_i32 = arith.constant 0 : i32
    %c0_i32_0 = arith.constant 0 : i32
    return %arg0, %c0_i32 : i32, i32
  }
}

</mosaic_0001>

<llo_original>
// kernel: tpu_custom_call.1
$region0: #{tpu_custom_call.1}
  #allocation0 [shape = 'u32[]', space=smem, size = 0x4, offset = 0x4, fixed_abs, tag = 'smem constant byte address 0x4 - core index']
  #allocation1 [shape = 'u32[144,128]{1,0:T(1,128)}', space=vmem, size = 0x12000, scoped, tag = 'internal scratch']
  %s0 = inlined_call_operand.vmem [shape: f32[16,16], index: 0, kind: input, shape index: {}]
  %s1 = inlined_call_operand.vmem [shape: f32[16,8], index: 1, kind: input, shape index: {}]
  %s2 = inlined_call_operand.hbm [shape: bf16[74,409], index: 2, kind: input, shape index: {}]
  %s3 = inlined_call_operand.hbm [shape: f32[16,153], index: 3, kind: output, shape index: {}]
  %s4 = sld [smem:[#allocation0]]
  $region49: #{tpu_custom_call.1} parent=0
    _
  %s6 = ssub.s32 1, %s4
  %s7 = scalar_select 0, %s6, %s4
  $region1: #{tpu_custom_call.1} parent=0
    #allocation2 [shape = 'u8[81920]{0}', space=vmem, size = 0x14000, scoped, tag = 'input window, operand 2, single buffered']
    #allocation3 [shape = 's32[2]{0}', space=sflag, size = 0x8, scoped, tag = 'scoped memory for tpu_custom_call.1']
    #allocation4 [shape = 's32[2]{0}', space=sflag, size = 0x8, scoped, tag = 'scoped memory for tpu_custom_call.1']
    #allocation5 [shape = 'u8[16384]{0}', space=vmem, size = 0x4000, scoped, tag = 'output window, operand 0']
    %8 = vsyncpa [#allocation3], 0
    %9 = vsyncpa [#allocation4], 0
    %s10 = scalar_lea.sflag [#allocation4], 1
    %11 = vsyncpa %s10, 0
    loop: start=0, step=1, limit=4
    $region2: #{tpu_custom_call.1} parent=1 // loop_pre_header
      _
    $region3: #{tpu_custom_call.1} parent=1 // loop_header
      %s13 = sphi 0, %s17
      %p14 = scmp.ge.s32.totalorder %s13, 4
      %s23 = sphi 0, %s25
      %s26 = sphi 0, %s23
      %s27 = sphi 0, %s26
      %s43 = sphi 0, %s27
      %s49 = sphi 0, %s51
      %s52 = sphi 0, %s49
      %s53 = sphi 0, %s52
      %s69 = sphi 0, %s53
      %s73 = sphi 0, %s73
      %s75 = sphi 0, %s73
      %s76 = sphi 0, %s75
      %s90 = sphi 0, %s76
      %s96 = sphi 0, %s98
      %s99 = sphi 0, %s96
      %s100 = sphi 0, %s99
      %s116 = sphi 0, %s100
    $region4: #{tpu_custom_call.1} parent=1 // loop_header_branch
      %16 = sbr.rel (%p14) target = $region8
    $region5: #{tpu_custom_call.1} parent=1 // loop_body
      %s18 = ssub.s32 %s13, 1
      %s19 = ssub.s32 %s13, 2
      %s20 = sadd.s32 %s13, 1
      %s21 = ssub.s32 %s13, %s20
      %p22 = scmp.eq.s32.totalorder %s21, 0
      %s24 = sadd.s32 %s23, 1
      %s25 = scalar_select %p22, %s23, %s24
      %p28 = pneg %p22
      %p29 = scmp.eq.s32.totalorder %s13, 1
      %p30 = por %p28, %p29
      %p31 = scmp.ne.s32.totalorder %s23, %s26
      %p32 = scmp.eq.s32.totalorder %s13, 0
      %p33 = por %p31, %p32
      %p34 = scmp.ne.s32.totalorder %s23, %s26
      %p35 = scmp.eq.s32.totalorder %s18, 1
      %p36 = por %p34, %p35
      %p37 = scmp.ne.s32.totalorder %s26, %s27
      %p38 = scmp.eq.s32.totalorder %s18, 0
      %p39 = por %p37, %p38
      %p40 = scmp.ne.s32.totalorder %s26, %s27
      %p41 = scmp.eq.s32.totalorder %s19, 1
      %p42 = por %p40, %p41
      %p44 = scmp.ne.s32.totalorder %s27, %s43
      %p45 = scmp.eq.s32.totalorder %s19, 0
      %p46 = por %p44, %p45
      %s47 = ssub.s32 %s13, %s20
      %p48 = scmp.eq.s32.totalorder %s47, 0
      %s50 = sadd.s32 %s49, 1
      %s51 = scalar_select %p48, %s49, %s50
      %p54 = pneg %p48
      %p55 = scmp.eq.s32.totalorder %s13, 1
      %p56 = por %p54, %p55
      %p57 = scmp.ne.s32.totalorder %s49, %s52
      %p58 = scmp.eq.s32.totalorder %s13, 0
      %p59 = por %p57, %p58
      %p60 = scmp.ne.s32.totalorder %s49, %s52
      %p61 = scmp.eq.s32.totalorder %s18, 1
      %p62 = por %p60, %p61
      %p63 = scmp.ne.s32.totalorder %s52, %s53
      %p64 = scmp.eq.s32.totalorder %s18, 0
      %p65 = por %p63, %p64
      %p66 = scmp.ne.s32.totalorder %s52, %s53
      %p67 = scmp.eq.s32.totalorder %s19, 1
      %p68 = por %p66, %p67
      %p70 = scmp.ne.s32.totalorder %s53, %s69
      %p71 = scmp.eq.s32.totalorder %s19, 0
      %p72 = por %p70, %p71
      %s74 = sadd.s32 %s73, 1
      %p77 = scmp.eq.s32.totalorder %s13, 1
      %p78 = scmp.ne.s32.totalorder %s73, %s75
      %p79 = scmp.eq.s32.totalorder %s13, 0
      %p80 = por %p78, %p79
      %p81 = scmp.ne.s32.totalorder %s73, %s75
      %p82 = scmp.eq.s32.totalorder %s18, 1
      %p83 = por %p81, %p82
      %p84 = scmp.ne.s32.totalorder %s75, %s76
      %p85 = scmp.eq.s32.totalorder %s18, 0
      %p86 = por %p84, %p85
      %p87 = scmp.ne.s32.totalorder %s75, %s76
      %p88 = scmp.eq.s32.totalorder %s19, 1
      %p89 = por %p87, %p88
      %p91 = scmp.ne.s32.totalorder %s76, %s90
      %p92 = scmp.eq.s32.totalorder %s19, 0
      %p93 = por %p91, %p92
      %s94 = ssub.s32 %s13, %s20
      %p95 = scmp.eq.s32.totalorder %s94, 0
      %s97 = sadd.s32 %s96, 1
      %s98 = scalar_select %p95, %s96, %s97
      %p101 = pneg %p95
      %p102 = scmp.eq.s32.totalorder %s13, 1
      %p103 = por %p101, %p102
      %p104 = scmp.ne.s32.totalorder %s96, %s99
      %p105 = scmp.eq.s32.totalorder %s13, 0
      %p106 = por %p104, %p105
      %p107 = scmp.ne.s32.totalorder %s96, %s99
      %p108 = scmp.eq.s32.totalorder %s18, 1
      %p109 = por %p107, %p108
      %p110 = scmp.ne.s32.totalorder %s99, %s100
      %p111 = scmp.eq.s32.totalorder %s18, 0
      %p112 = por %p110, %p111
      %p113 = scmp.ne.s32.totalorder %s99, %s100
      %p114 = scmp.eq.s32.totalorder %s19, 1
      %p115 = por %p113, %p114
      %p117 = scmp.ne.s32.totalorder %s100, %s116
      %p118 = scmp.eq.s32.totalorder %s19, 0
      %p119 = por %p117, %p118
      %p120 = scmp.le.s32.totalorder 1, %s13
      %p121 = scmp.lt.s32.totalorder %s13, 3
      %p122 = pnand %p120, %p121
      %p123 = pneg %p122
      // Predicated region
      $region9: #{tpu_custom_call.1} parent=5 // pred_check
        _
      $region10: #{tpu_custom_call.1} parent=5 // pred_check_branch
        %125 = sbr.rel (%p122) target = $region12
      $region11: #{tpu_custom_call.1} parent=5 // pred_region
        %s126 = ssub.s32 %s13, 1
        // Predicated region
        $region13: #{tpu_custom_call.1} parent=11 // pred_check
          %p127 = pneg %p86
        $region14: #{tpu_custom_call.1} parent=11 // pred_check_branch
          %129 = sbr.rel (%p127) target = $region16
        $region15: #{tpu_custom_call.1} parent=11 // pred_region
          %s131 = ssub.s32 2560, 2560
          %132 = vsyncadd [#allocation3], %s131
          %s133 = sshll.u32 [#allocation2], 4
          %s134 = int_to_ptr.vmem [resolvable:$true] %s133
          %139 = dma.hbm_to_vmem [thread:$0]  %s2, 2560, %s134, [#allocation3], 256, 256, 16
        $region16: #{tpu_custom_call.1} parent=11 // pred_fallthru
          _
      $region12: #{tpu_custom_call.1} parent=5 // pred_fallthru
        _
      %p140 = scmp.lt.s32.totalorder %s13, 2
      // Predicated region
      $region17: #{tpu_custom_call.1} parent=5 // pred_check
        %p141 = pneg %p140
      $region18: #{tpu_custom_call.1} parent=5 // pred_check_branch
        %143 = sbr.rel (%p141) target = $region20
      $region19: #{tpu_custom_call.1} parent=5 // pred_region
        // Predicated region
        $region21: #{tpu_custom_call.1} parent=19 // pred_check
          %p144 = pneg %p33
        $region22: #{tpu_custom_call.1} parent=19 // pred_check_branch
          %146 = sbr.rel (%p144) target = $region24
        $region23: #{tpu_custom_call.1} parent=19 // pred_region
          %p147 = scmp.lt.s32.totalorder %s13, 1
          %s148 = scalar_select %p147, %s13, 1
          %s149 = smul.addr %s148, 8
          %s150 = scalar_lea.vmem %s0, %s149
        $region24: #{tpu_custom_call.1} parent=19 // pred_fallthru
          _
        // Predicated region
        $region25: #{tpu_custom_call.1} parent=19 // pred_check
          %p151 = pneg %p59
        $region26: #{tpu_custom_call.1} parent=19 // pred_check_branch
          %153 = sbr.rel (%p151) target = $region28
        $region27: #{tpu_custom_call.1} parent=19 // pred_region
          %p154 = scmp.lt.s32.totalorder %s13, 1
          %s155 = scalar_select %p154, %s13, 1
          %s156 = smul.addr %s155, 8
          %s157 = scalar_lea.vmem %s1, %s156
        $region28: #{tpu_custom_call.1} parent=19 // pred_fallthru
          _
      $region20: #{tpu_custom_call.1} parent=5 // pred_fallthru
        _
      %p158 = scmp.le.s32.totalorder 1, %s13
      %p159 = scmp.lt.s32.totalorder %s13, 3
      %p160 = pnand %p158, %p159
      %p161 = pneg %p160
      // Predicated region
      $region29: #{tpu_custom_call.1} parent=5 // pred_check
        _
      $region30: #{tpu_custom_call.1} parent=5 // pred_check_branch
        %163 = sbr.rel (%p160) target = $region32
      $region31: #{tpu_custom_call.1} parent=5 // pred_region
        %s164 = ssub.s32 %s13, 1
        // Predicated region
        $region33: #{tpu_custom_call.1} parent=31 // pred_check
          %p165 = pneg %p86
        $region34: #{tpu_custom_call.1} parent=31 // pred_check_branch
          %167 = sbr.rel (%p165) target = $region36
        $region35: #{tpu_custom_call.1} parent=31 // pred_region
          %168 = dma.done [#allocation3], 2560
        $region36: #{tpu_custom_call.1} parent=31 // pred_fallthru
          _
        %p169 = scmp.lt.s32.totalorder %s18, 1
        %s170 = scalar_select %p169, %s18, 1
        %s171 = smul.addr %s170, 8
        %s172 = scalar_lea.vmem %s0, %s171
        %p173 = pneg %p39
        %p174 = pneg %p36
        %p175 = scmp.lt.s32.totalorder %s18, 1
        %s176 = scalar_select %p175, %s18, 1
        %s177 = smul.addr %s176, 8
        %s178 = scalar_lea.vmem %s1, %s177
        %p179 = pneg %p65
        %p180 = pneg %p62
        %p181 = pneg %p86
        %p182 = pneg %p83
        %p183 = pneg %p112
        %p184 = pneg %p109
        %s185 = sand.u32 %s99, 1
        %s186 = scalar_lea.sflag [#allocation4], %s185
        %s187 = sand.u32 %s99, 1
        %s188 = smul.addr %s187, 16
        %s189 = scalar_lea.vmem [#allocation5], %s188
        %p190 = scmp.lt.s32.totalorder %s18, 1
        %s191 = scalar_select %p190, %s18, 1
        %s192 = smul.addr %s191, 8
        %s193 = scalar_lea.vmem %s0, %s192
        %p194 = scmp.lt.s32.totalorder %s18, 1
        %s195 = scalar_select %p194, %s18, 1
        %s196 = smul.addr %s195, 8
        %s197 = scalar_lea.vmem %s1, %s196
        %v199 = vld [vmem:[%s193] sm:$0xff]
        %v200 = vpack.c.bf16 %v199, %v199
        %v201 = vunpack.c.l.bf16 %v200
        %v202 = vsub.f32 %v199, %v201
        %v203 = vpack.c.bf16 %v202, %v202
        %v204 = vunpack.c.l.bf16 %v203
        %v205 = vsub.f32 %v202, %v204
        %v206 = vpack.c.bf16 %v205, %v205
        %v207 = vunpack.c.l.bf16 %v206
        %209 = vrot.lane.b32.xlu0 %v204, 16
        %v210 = vpop.permute.xlu0 %209
        %213 = vrot.lane.b32.xlu0 %v207, 32
        %v214 = vpop.permute.xlu0 %213
        %vm216 = vcmask 130048
        %v217 = vsel %vm216, %v201, %v210
        %vm218 = vcmask 261120
        %v219 = vsel %vm218, %v217, %v214
        %vm220 = vcmask 392192
        %v221 = vsel %vm220, %v219, 1.0
        %v222 = vld [vmem:[%s197] sm:$0xff]
        %v223 = vpack.c.bf16 %v222, %v222
        %v224 = vunpack.c.l.bf16 %v223
        %v225 = vsub.f32 %v222, %v224
        %v226 = vpack.c.bf16 %v225, %v225
        %v227 = vunpack.c.l.bf16 %v226
        %v228 = vsub.f32 %v225, %v227
        %v229 = vpack.c.bf16 %v228, %v228
        %v230 = vunpack.c.l.bf16 %v229
        %232 = vrot.lane.b32.xlu0 %v227, 8
        %v233 = vpop.permute.xlu0 %232
        %236 = vrot.lane.b32.xlu0 %v230, 16
        %v237 = vpop.permute.xlu0 %236
        %vm239 = vcmask 64512
        %v240 = vsel %vm239, %v224, %v233
        %v241 = vsel %vm216, %v240, %v237
        %vm242 = vcmask 195584
        %v243 = vsel %vm242, %v241, 1.0
        %245 = vrot.lane.b32.xlu0 %v243, 49
        %v246 = vpop.permute.xlu0 %245
        %vm248 = vcmask 400384
        %v249 = vsel %vm248, %v221, %v246
        %v250 = vpack.c.bf16 %v249, %v249
        %v251 = vld [vmem:[#allocation2] sm:$0xff]
        %v252 = vld [vmem:[#allocation2 + $0x8] sm:$0xff]
        %v253 = vld [vmem:[#allocation2 + $0x10] sm:$0xff]
        %v254 = vld [vmem:[#allocation2 + $0x18] sm:$0xff]
        %v255 = vld [vmem:[#allocation2 + $0x20] sm:$0xff]
        %v256 = vld [vmem:[#allocation2 + $0x28] sm:$0xff]
        %v257 = vld [vmem:[#allocation2 + $0x30] sm:$0xff]
        %v258 = vld [vmem:[#allocation2 + $0x38] sm:$0xff]
        %v259 = vld [vmem:[#allocation2 + $0x40] sm:$0xff]
        %v260 = vld [vmem:[#allocation2 + $0x48] sm:$0xff]
        %v261 = vld [vmem:[#allocation2 + $0x50] sm:$0xff]
        %v262 = vld [vmem:[#allocation2 + $0x58] sm:$0xff]
        %v263 = vld [vmem:[#allocation2 + $0x60] sm:$0xff]
        %v264 = vld [vmem:[#allocation2 + $0x68] sm:$0xff]
        %v265 = vld [vmem:[#allocation2 + $0x70] sm:$0xff]
        %v266 = vld [vmem:[#allocation2 + $0x78] sm:$0xff]
        %v267 = vld [vmem:[#allocation2 + $0x80] sm:$0xff]
        %v268 = vld [vmem:[#allocation2 + $0x88] sm:$0xff]
        %v269 = vld [vmem:[#allocation2 + $0x90] sm:$0x11]
        %v270 = vld [vmem:[#allocation2 + $0x98] sm:$0x11]
        %v291 = vunpack.c.l.b16 %v251
        %v292 = vunpack.c.h.b16 %v251
        %v293 = vunpack.c.l.b16 %v252
        %v294 = vunpack.c.h.b16 %v252
        %v295 = vunpack.c.l.b16 %v253
        %v296 = vunpack.c.h.b16 %v253
        %v297 = vunpack.c.l.b16 %v254
        %v298 = vunpack.c.h.b16 %v254
        %v299 = vunpack.c.l.b16 %v255
        %v300 = vunpack.c.h.b16 %v255
        %v301 = vunpack.c.l.b16 %v256
        %v302 = vunpack.c.h.b16 %v256
        %v303 = vunpack.c.l.b16 %v257
        %v304 = vunpack.c.h.b16 %v257
        %v305 = vunpack.c.l.b16 %v258
        %v306 = vunpack.c.h.b16 %v258
        %v307 = vunpack.c.l.b16 %v259
        %v308 = vunpack.c.h.b16 %v259
        %v309 = vunpack.c.l.b16 %v260
        %v310 = vunpack.c.h.b16 %v260
        %v311 = vunpack.c.l.b16 %v261
        %v312 = vunpack.c.h.b16 %v261
        %v313 = vunpack.c.l.b16 %v262
        %v314 = vunpack.c.h.b16 %v262
        %v315 = vunpack.c.l.b16 %v263
        %v316 = vunpack.c.h.b16 %v263
        %v317 = vunpack.c.l.b16 %v264
        %v318 = vunpack.c.h.b16 %v264
        %v319 = vunpack.c.l.b16 %v265
        %v320 = vunpack.c.h.b16 %v265
        %v321 = vunpack.c.l.b16 %v266
        %v322 = vunpack.c.h.b16 %v266
        %v323 = vunpack.c.l.b16 %v267
        %v324 = vunpack.c.h.b16 %v267
        %v325 = vunpack.c.l.b16 %v268
        %v326 = vunpack.c.h.b16 %v268
        %v327 = vunpack.c.l.b16 %v269
        %v328 = vunpack.c.h.b16 %v269
        %v329 = vunpack.c.l.b16 %v270
        %v330 = vunpack.c.h.b16 %v270
        %v331 = vpack.c.b16 %v295, %v291
        %v332 = vpack.c.b16 %v296, %v292
        %v333 = vpack.c.b16 %v297, %v293
        %v334 = vpack.c.b16 %v298, %v294
        %v335 = vpack.c.b16 %v303, %v299
        %v336 = vpack.c.b16 %v304, %v300
        %v337 = vpack.c.b16 %v305, %v301
        %v338 = vpack.c.b16 %v306, %v302
        %v339 = vpack.c.b16 %v311, %v307
        %v340 = vpack.c.b16 %v312, %v308
        %v341 = vpack.c.b16 %v313, %v309
        %v342 = vpack.c.b16 %v314, %v310
        %v343 = vpack.c.b16 %v319, %v315
        %v344 = vpack.c.b16 %v320, %v316
        %v345 = vpack.c.b16 %v321, %v317
        %v346 = vpack.c.b16 %v322, %v318
        %v347 = vpack.c.b16 %v327, %v323
        %v348 = vpack.c.b16 %v328, %v324
        %v349 = vpack.c.b16 %v329, %v325
        %v350 = vpack.c.b16 %v330, %v326
        %vm367 = vcmask 605184
        %v369 = vsel %vm367, %v250, 0
        %vm371 = vcmask 1044480
        %v373 = vsel %vm371, %v347, 0
        %v376 = vsel %vm371, %v348, 0
        %v379 = vsel %vm371, %v349, 0
        %v382 = vsel %vm371, %v350, 0
        %384 = vmatprep.subr.bf16.mxu0 %v332
        %385 = vmatpush1.bf16.msra.mxu0 %v331
        %386 = vmatprep.subr.bf16.mxu0 %v336
        %387 = vmatpush1.bf16.msra.mxu0 %v335
        %388 = vmatprep.subr.bf16.mxu0 %v340
        %389 = vmatpush1.bf16.msra.mxu0 %v339
        %390 = vmatprep.subr.bf16.mxu0 %v344
        %391 = vmatpush1.bf16.msra.mxu0 %v343
        %392 = vmatprep.subr.bf16.mxu0 %v376
        %393 = vmatpush1.bf16.msra.mxu0 %v373
        %394 = vmatprep.subr.bf16.mxu0 0
        %395 = vmatpush1.bf16.msra.mxu0 0
        %396 = vmatprep.subr.bf16.mxu0 0
        %397 = vmatpush1.bf16.msra.mxu0 0
        %398 = vmatprep.subr.bf16.mxu0 0
        %399 = vmatpush1.bf16.msra.mxu0 0
        %400 = vmatprep.subr.bf16.mxu0 0
        %401 = vmatpush1.bf16.msra.mxu0 0
        %402 = vmatprep.subr.bf16.mxu0 0
        %403 = vmatpush1.bf16.msra.mxu0 0
        %404 = vmatprep.subr.bf16.mxu0 0
        %405 = vmatpush1.bf16.msra.mxu0 0
        %406 = vmatprep.subr.bf16.mxu0 0
        %407 = vmatpush1.bf16.msra.mxu0 0
        %408 = vmatprep.subr.bf16.mxu0 0
        %409 = vmatpush1.bf16.msra.mxu0 0
        %410 = vmatprep.subr.bf16.mxu0 0
        %411 = vmatpush1.bf16.msra.mxu0 0
        %412 = vmatprep.subr.bf16.mxu0 0
        %413 = vmatpush1.bf16.msra.mxu0 0
        %414 = vmatprep.subr.bf16.mxu0 0
        %415 = vmatpush1.bf16.msra.mxu0 0
        %416 = vmatprep.mubr.bf16.mxu0 0
        %417 = vmatmul.mubr.bf16.gmra.mrb[0].mxu0 %v369
        %v418 = vpop.f32.mrb[0].mxu0
        %v419 = vadd.f32 0.0, %v418
        %v420 = vpop.f32.mrb[0].mxu0
        %v421 = vadd.f32 0.0, %v420
        %v422 = vpop.f32.mrb[0].mxu0
        %v423 = vpop.f32.mrb[0].mxu0
        %424 = vdwg.mxu0
        %425 = vmatprep.subr.bf16.mxu0 %v334
        %426 = vmatpush1.bf16.msra.mxu0 %v333
        %427 = vmatprep.subr.bf16.mxu0 %v338
        %428 = vmatpush1.bf16.msra.mxu0 %v337
        %429 = vmatprep.subr.bf16.mxu0 %v342
        %430 = vmatpush1.bf16.msra.mxu0 %v341
        %431 = vmatprep.subr.bf16.mxu0 %v346
        %432 = vmatpush1.bf16.msra.mxu0 %v345
        %433 = vmatprep.subr.bf16.mxu0 %v382
        %434 = vmatpush1.bf16.msra.mxu0 %v379
        %435 = vmatprep.subr.bf16.mxu0 0
        %436 = vmatpush1.bf16.msra.mxu0 0
        %437 = vmatprep.subr.bf16.mxu0 0
        %438 = vmatpush1.bf16.msra.mxu0 0
        %439 = vmatprep.subr.bf16.mxu0 0
        %440 = vmatpush1.bf16.msra.mxu0 0
        %441 = vmatprep.subr.bf16.mxu0 0
        %442 = vmatpush1.bf16.msra.mxu0 0
        %443 = vmatprep.subr.bf16.mxu0 0
        %444 = vmatpush1.bf16.msra.mxu0 0
        %445 = vmatprep.subr.bf16.mxu0 0
        %446 = vmatpush1.bf16.msra.mxu0 0
        %447 = vmatprep.subr.bf16.mxu0 0
        %448 = vmatpush1.bf16.msra.mxu0 0
        %449 = vmatprep.subr.bf16.mxu0 0
        %450 = vmatpush1.bf16.msra.mxu0 0
        %451 = vmatprep.subr.bf16.mxu0 0
        %452 = vmatpush1.bf16.msra.mxu0 0
        %453 = vmatprep.subr.bf16.mxu0 0
        %454 = vmatpush1.bf16.msra.mxu0 0
        %455 = vmatprep.subr.bf16.mxu0 0
        %456 = vmatpush1.bf16.msra.mxu0 0
        %457 = vmatprep.mubr.bf16.mxu0 0
        %458 = vmatmul.mubr.bf16.gmra.mrb[0].mxu0 %v369
        %v459 = vpop.f32.mrb[0].mxu0
        %v460 = vadd.f32 0.0, %v459
        %v461 = vpop.f32.mrb[0].mxu0
        %v462 = vadd.f32 0.0, %v461
        %v463 = vpop.f32.mrb[0].mxu0
        %v464 = vpop.f32.mrb[0].mxu0
        %465 = vdwg.mxu0
        %v466 = vmul.f32 %v419, %v460
        %v467 = vmul.f32 %v421, %v462
        %468 = vst [vmem:[%s189] sm:$0xff] %v466
        %vm469 = vcmask 203776
        %470 = vst.msk [vmem:[%s189 + $0x8] sm:$0xff] %vm469, %v467
        %s471 = sand.u32 %s99, 1
        %s472 = scalar_lea.sflag [#allocation4], %s471
        %s473 = sand.u32 %s99, 1
        %s474 = smul.addr %s473, 16
        %s475 = scalar_lea.vmem [#allocation5], %s474
        // Predicated region
        $region37: #{tpu_custom_call.1} parent=31 // pred_check
          %p476 = pneg %p109
        $region38: #{tpu_custom_call.1} parent=31 // pred_check_branch
          %478 = sbr.rel (%p476) target = $region40
        $region39: #{tpu_custom_call.1} parent=31 // pred_region
          %s480 = ssub.s32 256, 256
          %481 = vsyncadd %s472, %s480
          %s482 = smul.addr %s18, 2
          %s483 = smul.addr %s482, 128
          %s484 = scalar_lea.hbm %s3, %s483
          %s486 = sshll.u32 %s475, 4
          %s487 = int_to_ptr.vmem [resolvable:$true] %s486
          %489 = dma.vmem_to_hbm [thread:$0]  %s487, 256, %s484, %s472
        $region40: #{tpu_custom_call.1} parent=31 // pred_fallthru
          _
      $region32: #{tpu_custom_call.1} parent=5 // pred_fallthru
        _
      %p490 = scmp.le.s32.totalorder 2, %s13
      // Predicated region
      $region41: #{tpu_custom_call.1} parent=5 // pred_check
        %p491 = pneg %p490
      $region42: #{tpu_custom_call.1} parent=5 // pred_check_branch
        %493 = sbr.rel (%p491) target = $region44
      $region43: #{tpu_custom_call.1} parent=5 // pred_region
        %s494 = ssub.s32 %s13, 2
        // Predicated region
        $region45: #{tpu_custom_call.1} parent=43 // pred_check
          %p495 = pneg %p115
        $region46: #{tpu_custom_call.1} parent=43 // pred_check_branch
          %497 = sbr.rel (%p495) target = $region48
        $region47: #{tpu_custom_call.1} parent=43 // pred_region
          %s498 = sand.u32 %s100, 1
          %s499 = scalar_lea.sflag [#allocation4], %s498
          %s500 = sand.u32 %s100, 1
          %s501 = smul.addr %s500, 16
          %s502 = scalar_lea.vmem [#allocation5], %s501
          %503 = dma.done %s499, 256
        $region48: #{tpu_custom_call.1} parent=43 // pred_fallthru
          _
      $region44: #{tpu_custom_call.1} parent=5 // pred_fallthru
        _
    $region6: #{tpu_custom_call.1} parent=1 // loop_footer
      %s17 = sadd.s32 1, %s13
    $region7: #{tpu_custom_call.1} parent=1 // loop_footer_branch
      %12 = sbr.rel target = $region3
    $region8: #{tpu_custom_call.1} parent=1 // loop_exit
      _
    %504 = vsyncpa [#allocation3], 1
    %s505 = scalar_lea.sflag [#allocation3], 1
    %506 = vsyncpa %s505, 1
    %507 = vsyncpa [#allocation4], 1
    %s508 = scalar_lea.sflag [#allocation4], 1
    %509 = vsyncpa %s508, 1

</llo_original>
